<compile_context>
chip_gen: v7x
topology: tpu7x:2x2x1
jax: 0.10.0
libtpu: 0.0.40
codegen_flags: <defaults>
</compile_context>

<pallas_src>
import jax
import jax.numpy as jnp
from jax.experimental import pallas as pl
from jax.experimental.pallas import tpu as pltpu

D_IN = 257          # logical feature dim of the module
D_PAD = 384         # 3 * 128, lane-aligned padding of the 257 dim


def _audio_encoder_kernel(x_ref, w1_ref, b1_ref, wh_ref, bh_ref, out_ref):
    # x: (B, 384) f32, w1: (384, 384) bf16, b1: (1, 384) f32
    # wh: (384, 2*latent) bf16 (folded w2@[wm||wv]), bh: (1, 2*latent) f32
    x = x_ref[...].astype(jnp.bfloat16)

    # lin_lays first Linear + ReLU (f32 accumulation on the MXU).
    h = jnp.dot(x, w1_ref[...], preferred_element_type=jnp.float32) + b1_ref[...]
    h = jnp.maximum(h, 0.0)

    # Folded (Linear2 -> {mu, var}) as a single lane-dense matmul.
    out_ref[...] = (
        jnp.dot(h.astype(jnp.bfloat16), wh_ref[...],
                preferred_element_type=jnp.float32)
        + bh_ref[...]
    )


def prepare_params(params, latent_dim):
    """Fold w2/b2 into the heads, fuse mu/var, pad 257 -> 384, cast weights to bf16."""
    w1, b1 = params["w1"], params["b1"]
    w2, b2 = params["w2"], params["b2"]
    wm, bm = params["wm"], params["bm"]
    wv, bv = params["wv"], params["bv"]

    # hidden = relu(x@w1+b1) @ w2 + b2
    # mean   = hidden @ wm + bm = relu(x@w1+b1) @ (w2@wm) + (b2@wm + bm)   (exact)
    wm_f = w2 @ wm
    wv_f = w2 @ wv
    bm_f = b2 @ wm + bm
    bv_f = b2 @ wv + bv

    # Fuse the two heads: one (257, 2*latent) weight, one (1, 2*latent) bias.
    wh = jnp.concatenate([wm_f, wv_f], axis=1)
    bh = jnp.concatenate([bm_f, bv_f], axis=1)

    # Zero-pad the ragged 257 dim to 384 (exact: ReLU(0)=0 and zero weight rows).
    w1_p = jnp.zeros((D_PAD, D_PAD), jnp.float32).at[:D_IN, :D_IN].set(w1)
    b1_p = jnp.zeros((1, D_PAD), jnp.float32).at[:, :D_IN].set(b1)
    wh_p = jnp.zeros((D_PAD, 2 * latent_dim), jnp.float32).at[:D_IN, :].set(wh)

    return dict(
        w1=w1_p.astype(jnp.bfloat16),   # bf16 weights: half the HBM->VMEM bytes
        b1=b1_p,                        # biases stay f32
        wh=wh_p.astype(jnp.bfloat16),
        bh=bh,
    )


def audio_encoder_forward(x, prep, latent_dim):
    """x: (B, 257) f32. prep: output of prepare_params. Returns (mean, log_var)."""
    B = x.shape[0]
    x_p = jnp.zeros((B, D_PAD), x.dtype).at[:, :D_IN].set(x)

    vmem = pl.BlockSpec(memory_space=pltpu.MemorySpace.VMEM)

    flops = 2 * B * (D_PAD * D_PAD + D_PAD * 2 * latent_dim)
    bytes_accessed = (
        x_p.size * 4                        # activations in
        + prep["w1"].size * 2               # bf16 weights
        + prep["wh"].size * 2
        + prep["b1"].size * 4               # f32 biases
        + prep["bh"].size * 4
        + B * 2 * latent_dim * 4            # output
    )

    out = pl.pallas_call(
        _audio_encoder_kernel,
        out_shape=jax.ShapeDtypeStruct((B, 2 * latent_dim), jnp.float32),
        in_specs=[vmem] * 5,
        out_specs=vmem,
        cost_estimate=pl.CostEstimate(
            flops=flops, transcendentals=0, bytes_accessed=bytes_accessed),
    )(x_p, prep["w1"], prep["b1"], prep["wh"], prep["bh"])

    # Split the fused head output back into mean / log_var in the wrapper.
    return out[:, :latent_dim], out[:, latent_dim:]


def init_params(key, latent_dim):
    """Deterministic synthetic parameters matching the PyTorch module shapes."""
    ks = jax.random.split(key, 8)
    d = D_IN

    def lin(kw, kb, fan_in, fan_out):
        # small-scale init, (in, out) layout for x @ W + b
        w = jax.random.normal(kw, (fan_in, fan_out), jnp.float32) * 0.05
        b = jax.random.normal(kb, (1, fan_out), jnp.float32) * 0.05
        return w, b

    w1, b1 = lin(ks[0], ks[1], d, d)
    w2, b2 = lin(ks[2], ks[3], d, d)
    wm, bm = lin(ks[4], ks[5], d, latent_dim)
    wv, bv = lin(ks[6], ks[7], d, latent_dim)
    return dict(w1=w1, b1=b1, w2=w2, b2=b2, wm=wm, bm=bm, wv=wv, bv=bv)


def reference_forward(x, p):
    """Original (unfolded, f32) module semantics."""
    h = jnp.maximum(x @ p["w1"] + p["b1"], 0.0)
    h = h @ p["w2"] + p["b2"]
    return h @ p["wm"] + p["bm"], h @ p["wv"] + p["bv"]


if __name__ == "__main__":
    key = jax.random.PRNGKey(0)
    k_x, k_p = jax.random.split(key)

    batch = 8
    latent_dim = 32
    x = jax.random.normal(k_x, (batch, D_IN), jnp.float32)
    params = init_params(k_p, latent_dim)
    prep = prepare_params(params, latent_dim)

    mean, log_var = audio_encoder_forward(x, prep, latent_dim)
    jax.block_until_ready((mean, log_var))

    ref_mean, ref_log_var = reference_forward(x, params)
    assert mean.shape == (batch, latent_dim)
    assert log_var.shape == (batch, latent_dim)
    # bf16 weight cast is a deliberate bandwidth/precision trade-off; folding
    # and padding are exact -> tolerance reflects bf16 rounding only.
    assert jnp.allclose(mean, ref_mean, atol=2e-2, rtol=2e-2)
    assert jnp.allclose(log_var, ref_log_var, atol=2e-2, rtol=2e-2)

    print("KERNEL_OK")
</pallas_src>

<mosaic_0001>
module attributes {stable_mosaic.version = 11 : i64} {
  func.func @_audio_encoder_kernel(%arg0: memref<8x384xf32, #tpu.memory_space<vmem>>, %arg1: memref<384x384xbf16, #tpu.memory_space<vmem>>, %arg2: memref<1x384xf32, #tpu.memory_space<vmem>>, %arg3: memref<384x64xbf16, #tpu.memory_space<vmem>>, %arg4: memref<1x64xf32, #tpu.memory_space<vmem>>, %arg5: memref<8x64xf32, #tpu.memory_space<vmem>>) attributes {dimension_semantics = [], scalar_prefetch = 0 : i64, scratch_operands = 0 : i64, tpu.core_type = #tpu.core_type<tc>} {
    %c0 = arith.constant 0 : index
    %c0_0 = arith.constant 0 : index
    %0 = vector.load %arg0[%c0, %c0_0] : memref<8x384xf32, #tpu.memory_space<vmem>>, vector<8x384xf32>
    %1 = arith.truncf %0 : vector<8x384xf32> to vector<8x384xbf16>
    %c0_1 = arith.constant 0 : index
    %c0_2 = arith.constant 0 : index
    %2 = vector.load %arg1[%c0_1, %c0_2] : memref<384x384xbf16, #tpu.memory_space<vmem>>, vector<384x384xbf16>
    %cst = arith.constant dense<0.000000e+00> : vector<8x384xf32>
    %3 = tpu.matmul %1, %2, %cst {dimension_numbers = #tpu.dot_dimension_numbers<[1], [0], [0], [1], [0, 0, 1, 1], [], []>} : vector<8x384xbf16>, vector<384x384xbf16>, vector<8x384xf32> -> vector<8x384xf32>
    %c0_3 = arith.constant 0 : index
    %c0_4 = arith.constant 0 : index
    %4 = vector.load %arg2[%c0_3, %c0_4] : memref<1x384xf32, #tpu.memory_space<vmem>>, vector<1x384xf32>
    %5 = vector.broadcast %4 : vector<1x384xf32> to vector<8x384xf32>
    %6 = arith.addf %3, %5 : vector<8x384xf32>
    %cst_5 = arith.constant 0.000000e+00 : f32
    %7 = vector.broadcast %cst_5 : f32 to vector<8x384xf32>
    %8 = arith.maximumf %6, %7 : vector<8x384xf32>
    %9 = arith.truncf %8 : vector<8x384xf32> to vector<8x384xbf16>
    %c0_6 = arith.constant 0 : index
    %c0_7 = arith.constant 0 : index
    %10 = vector.load %arg3[%c0_6, %c0_7] : memref<384x64xbf16, #tpu.memory_space<vmem>>, vector<384x64xbf16>
    %cst_8 = arith.constant dense<0.000000e+00> : vector<8x64xf32>
    %11 = tpu.matmul %9, %10, %cst_8 {dimension_numbers = #tpu.dot_dimension_numbers<[1], [0], [0], [1], [0, 0, 1, 1], [], []>} : vector<8x384xbf16>, vector<384x64xbf16>, vector<8x64xf32> -> vector<8x64xf32>
    %c0_9 = arith.constant 0 : index
    %c0_10 = arith.constant 0 : index
    %12 = vector.load %arg4[%c0_9, %c0_10] : memref<1x64xf32, #tpu.memory_space<vmem>>, vector<1x64xf32>
    %13 = vector.broadcast %12 : vector<1x64xf32> to vector<8x64xf32>
    %14 = arith.addf %11, %13 : vector<8x64xf32>
    %c0_11 = arith.constant 0 : index
    %c0_12 = arith.constant 0 : index
    %15 = vector.load %arg5[%c0_11, %c0_12] : memref<8x64xf32, #tpu.memory_space<vmem>>, vector<8x64xf32>
    tpu.vector_store %arg5[%c0_11, %c0_12], %14 {strides = array<i32>} : memref<8x64xf32, #tpu.memory_space<vmem>>, vector<8x64xf32>,
    return
  }
}

</mosaic_0001>

<llo_original>
// kernel: tpu_custom_call.1
$region0: #{tpu_custom_call.1}
  #allocation0 [shape = 'u32[]', space=smem, size = 0x4, offset = 0x4, fixed_abs, tag = 'smem constant byte address 0x4 - core index']
  #allocation1 [shape = 'u32[144,128]{1,0:T(1,128)}', space=vmem, size = 0x12000, scoped, tag = 'internal scratch']
  %s0 = inlined_call_operand.vmem [shape: f32[8,384], index: 0, kind: input, shape index: {}]
  %s1 = inlined_call_operand.hbm [shape: bf16[384,384], index: 1, kind: input, shape index: {}]
  %s2 = inlined_call_operand.vmem [shape: f32[1,384], index: 2, kind: input, shape index: {}]
  %s3 = inlined_call_operand.vmem [shape: bf16[384,64], index: 3, kind: input, shape index: {}]
  %s4 = inlined_call_operand.vmem [shape: f32[1,64], index: 4, kind: input, shape index: {}]
  %s5 = inlined_call_operand.hbm [shape: f32[8,64], index: 5, kind: output, shape index: {}]
  %s6 = sld [smem:[#allocation0]]
  $region34: #{tpu_custom_call.1} parent=0
    _
  %s8 = ssub.s32 1, %s6
  %s9 = scalar_select 0, %s8, %s6
  $region1: #{tpu_custom_call.1} parent=0
    #allocation2 [shape = 'u8[294912]{0}', space=vmem, size = 0x48000, scoped, tag = 'input window, operand 1, single buffered']
    #allocation3 [shape = 's32[1]{0}', space=sflag, size = 0x4, scoped, tag = 'scoped memory for tpu_custom_call.1']
    #allocation4 [shape = 's32[1]{0}', space=sflag, size = 0x4, scoped, tag = 'scoped memory for tpu_custom_call.1']
    #allocation5 [shape = 'u8[4096]{0}', space=vmem, size = 0x1000, scoped, tag = 'output window, operand 0, single buffered']
    %10 = vsyncpa [#allocation3], 0
    %11 = vsyncpa [#allocation4], 0
    // Predicated region
    $region2: #{tpu_custom_call.1} parent=1 // pred_check
      _
    $region3: #{tpu_custom_call.1} parent=1 // pred_check_branch
      %13 = sbr.rel (0) target = $region5
    $region4: #{tpu_custom_call.1} parent=1 // pred_region
      _
    $region5: #{tpu_custom_call.1} parent=1 // pred_fallthru
      _
    // Predicated region
    $region6: #{tpu_custom_call.1} parent=1 // pred_check
      _
    $region7: #{tpu_custom_call.1} parent=1 // pred_check_branch
      %15 = sbr.rel (0) target = $region9
    $region8: #{tpu_custom_call.1} parent=1 // pred_region
      %s17 = ssub.s32 9216, 9216
      %18 = vsyncadd [#allocation3], %s17
      %s19 = sshll.u32 [#allocation2], 4
      %s20 = int_to_ptr.vmem [resolvable:$true] %s19
      %25 = dma.hbm_to_vmem [thread:$0]  %s1, 9216, %s20, [#allocation3], 192, 192, 12
    $region9: #{tpu_custom_call.1} parent=1 // pred_fallthru
      _
    // Predicated region
    $region10: #{tpu_custom_call.1} parent=1 // pred_check
      _
    $region11: #{tpu_custom_call.1} parent=1 // pred_check_branch
      %27 = sbr.rel (0) target = $region13
    $region12: #{tpu_custom_call.1} parent=1 // pred_region
      _
    $region13: #{tpu_custom_call.1} parent=1 // pred_fallthru
      _
    // Predicated region
    $region14: #{tpu_custom_call.1} parent=1 // pred_check
      _
    $region15: #{tpu_custom_call.1} parent=1 // pred_check_branch
      %29 = sbr.rel (0) target = $region17
    $region16: #{tpu_custom_call.1} parent=1 // pred_region
      _
    $region17: #{tpu_custom_call.1} parent=1 // pred_fallthru
      _
    // Predicated region
    $region18: #{tpu_custom_call.1} parent=1 // pred_check
      _
    $region19: #{tpu_custom_call.1} parent=1 // pred_check_branch
      %31 = sbr.rel (0) target = $region21
    $region20: #{tpu_custom_call.1} parent=1 // pred_region
      _
    $region21: #{tpu_custom_call.1} parent=1 // pred_fallthru
      _
    // Predicated region
    $region22: #{tpu_custom_call.1} parent=1 // pred_check
      _
    $region23: #{tpu_custom_call.1} parent=1 // pred_check_branch
      %33 = sbr.rel (0) target = $region25
    $region24: #{tpu_custom_call.1} parent=1 // pred_region
      %34 = dma.done [#allocation3], 9216
    $region25: #{tpu_custom_call.1} parent=1 // pred_fallthru
      _
    %v36 = vld [vmem:[%s0] sm:$0xff]
    %v37 = vld [vmem:[%s0 + $0x8] sm:$0xff]
    %v38 = vld [vmem:[%s0 + $0x10] sm:$0xff]
    %v39 = vpack.c.bf16 %v36, %v36
    %v40 = vpack.c.bf16 %v37, %v37
    %v41 = vpack.c.bf16 %v38, %v38
    %v42 = vld [vmem:[#allocation2] sm:$0xff]
    %v43 = vld [vmem:[#allocation2 + $0x8] sm:$0xf]
    %v44 = vld [vmem:[#allocation2 + $0xc] sm:$0xff]
    %v45 = vld [vmem:[#allocation2 + $0x14] sm:$0xf]
    %v46 = vld [vmem:[#allocation2 + $0x18] sm:$0xff]
    %v47 = vld [vmem:[#allocation2 + $0x20] sm:$0xf]
    %v48 = vld [vmem:[#allocation2 + $0x24] sm:$0xff]
    %v49 = vld [vmem:[#allocation2 + $0x2c] sm:$0xf]
    %v50 = vld [vmem:[#allocation2 + $0x30] sm:$0xff]
    %v51 = vld [vmem:[#allocation2 + $0x38] sm:$0xf]
    %v52 = vld [vmem:[#allocation2 + $0x3c] sm:$0xff]
    %v53 = vld [vmem:[#allocation2 + $0x44] sm:$0xf]
    %v54 = vld [vmem:[#allocation2 + $0x48] sm:$0xff]
    %v55 = vld [vmem:[#allocation2 + $0x50] sm:$0xf]
    %v56 = vld [vmem:[#allocation2 + $0x54] sm:$0xff]
    %v57 = vld [vmem:[#allocation2 + $0x5c] sm:$0xf]
    %v58 = vld [vmem:[#allocation2 + $0x60] sm:$0xff]
    %v59 = vld [vmem:[#allocation2 + $0x68] sm:$0xf]
    %v60 = vld [vmem:[#allocation2 + $0x6c] sm:$0xff]
    %v61 = vld [vmem:[#allocation2 + $0x74] sm:$0xf]
    %v62 = vld [vmem:[#allocation2 + $0x78] sm:$0xff]
    %v63 = vld [vmem:[#allocation2 + $0x80] sm:$0xf]
    %v64 = vld [vmem:[#allocation2 + $0x84] sm:$0xff]
    %v65 = vld [vmem:[#allocation2 + $0x8c] sm:$0xf]
    %v66 = vld [vmem:[#allocation2 + $0x90] sm:$0xff]
    %v67 = vld [vmem:[#allocation2 + $0x98] sm:$0xf]
    %v68 = vld [vmem:[#allocation2 + $0x9c] sm:$0xff]
    %v69 = vld [vmem:[#allocation2 + $0xa4] sm:$0xf]
    %v70 = vld [vmem:[#allocation2 + $0xa8] sm:$0xff]
    %v71 = vld [vmem:[#allocation2 + $0xb0] sm:$0xf]
    %v72 = vld [vmem:[#allocation2 + $0xb4] sm:$0xff]
    %v73 = vld [vmem:[#allocation2 + $0xbc] sm:$0xf]
    %v74 = vld [vmem:[#allocation2 + $0xc0] sm:$0xff]
    %v75 = vld [vmem:[#allocation2 + $0xc8] sm:$0xf]
    %v76 = vld [vmem:[#allocation2 + $0xcc] sm:$0xff]
    %v77 = vld [vmem:[#allocation2 + $0xd4] sm:$0xf]
    %v78 = vld [vmem:[#allocation2 + $0xd8] sm:$0xff]
    %v79 = vld [vmem:[#allocation2 + $0xe0] sm:$0xf]
    %v80 = vld [vmem:[#allocation2 + $0xe4] sm:$0xff]
    %v81 = vld [vmem:[#allocation2 + $0xec] sm:$0xf]
    %v82 = vld [vmem:[#allocation2 + $0xf0] sm:$0xff]
    %v83 = vld [vmem:[#allocation2 + $0xf8] sm:$0xf]
    %v84 = vld [vmem:[#allocation2 + $0xfc] sm:$0xff]
    %v85 = vld [vmem:[#allocation2 + $0x104] sm:$0xf]
    %v86 = vld [vmem:[#allocation2 + $0x108] sm:$0xff]
    %v87 = vld [vmem:[#allocation2 + $0x110] sm:$0xf]
    %v88 = vld [vmem:[#allocation2 + $0x114] sm:$0xff]
    %v89 = vld [vmem:[#allocation2 + $0x11c] sm:$0xf]
    %v90 = vld [vmem:[#allocation2 + $0x120] sm:$0xff]
    %v91 = vld [vmem:[#allocation2 + $0x128] sm:$0xf]
    %v92 = vld [vmem:[#allocation2 + $0x12c] sm:$0xff]
    %v93 = vld [vmem:[#allocation2 + $0x134] sm:$0xf]
    %v94 = vld [vmem:[#allocation2 + $0x138] sm:$0xff]
    %v95 = vld [vmem:[#allocation2 + $0x140] sm:$0xf]
    %v96 = vld [vmem:[#allocation2 + $0x144] sm:$0xff]
    %v97 = vld [vmem:[#allocation2 + $0x14c] sm:$0xf]
    %v98 = vld [vmem:[#allocation2 + $0x150] sm:$0xff]
    %v99 = vld [vmem:[#allocation2 + $0x158] sm:$0xf]
    %v100 = vld [vmem:[#allocation2 + $0x15c] sm:$0xff]
    %v101 = vld [vmem:[#allocation2 + $0x164] sm:$0xf]
    %v102 = vld [vmem:[#allocation2 + $0x168] sm:$0xff]
    %v103 = vld [vmem:[#allocation2 + $0x170] sm:$0xf]
    %v104 = vld [vmem:[#allocation2 + $0x174] sm:$0xff]
    %v105 = vld [vmem:[#allocation2 + $0x17c] sm:$0xf]
    %v106 = vld [vmem:[#allocation2 + $0x180] sm:$0xff]
    %v107 = vld [vmem:[#allocation2 + $0x188] sm:$0xf]
    %v108 = vld [vmem:[#allocation2 + $0x18c] sm:$0xff]
    %v109 = vld [vmem:[#allocation2 + $0x194] sm:$0xf]
    %v110 = vld [vmem:[#allocation2 + $0x198] sm:$0xff]
    %v111 = vld [vmem:[#allocation2 + $0x1a0] sm:$0xf]
    %v112 = vld [vmem:[#allocation2 + $0x1a4] sm:$0xff]
    %v113 = vld [vmem:[#allocation2 + $0x1ac] sm:$0xf]
    %v114 = vld [vmem:[#allocation2 + $0x1b0] sm:$0xff]
    %v115 = vld [vmem:[#allocation2 + $0x1b8] sm:$0xf]
    %v116 = vld [vmem:[#allocation2 + $0x1bc] sm:$0xff]
    %v117 = vld [vmem:[#allocation2 + $0x1c4] sm:$0xf]
    %v118 = vld [vmem:[#allocation2 + $0x1c8] sm:$0xff]
    %v119 = vld [vmem:[#allocation2 + $0x1d0] sm:$0xf]
    %v120 = vld [vmem:[#allocation2 + $0x1d4] sm:$0xff]
    %v121 = vld [vmem:[#allocation2 + $0x1dc] sm:$0xf]
    %v122 = vld [vmem:[#allocation2 + $0x1e0] sm:$0xff]
    %v123 = vld [vmem:[#allocation2 + $0x1e8] sm:$0xf]
    %v124 = vld [vmem:[#allocation2 + $0x1ec] sm:$0xff]
    %v125 = vld [vmem:[#allocation2 + $0x1f4] sm:$0xf]
    %v126 = vld [vmem:[#allocation2 + $0x1f8] sm:$0xff]
    %v127 = vld [vmem:[#allocation2 + $0x200] sm:$0xf]
    %v128 = vld [vmem:[#allocation2 + $0x204] sm:$0xff]
    %v129 = vld [vmem:[#allocation2 + $0x20c] sm:$0xf]
    %v130 = vld [vmem:[#allocation2 + $0x210] sm:$0xff]
    %v131 = vld [vmem:[#allocation2 + $0x218] sm:$0xf]
    %v132 = vld [vmem:[#allocation2 + $0x21c] sm:$0xff]
    %v133 = vld [vmem:[#allocation2 + $0x224] sm:$0xf]
    %v134 = vld [vmem:[#allocation2 + $0x228] sm:$0xff]
    %v135 = vld [vmem:[#allocation2 + $0x230] sm:$0xf]
    %v136 = vld [vmem:[#allocation2 + $0x234] sm:$0xff]
    %v137 = vld [vmem:[#allocation2 + $0x23c] sm:$0xf]
    %v138 = vld [vmem:[%s2] sm:$0x7]
    %v140 = vlaneseq
    %v141 = vshrl.u32 %v140, 7
    %v142 = vsub.s32 0, %v141
    %v143 = vrot.slane %v138, %v142
    %v144 = vlaneseq
    %v145 = vshrl.u32 %v144, 7
    %v146 = vsub.s32 1, %v145
    %v147 = vrot.slane %v138, %v146
    %v148 = vlaneseq
    %v149 = vshrl.u32 %v148, 7
    %v150 = vsub.s32 2, %v149
    %v151 = vrot.slane %v138, %v150
    %v251 = vunpack.c.l.b16 %v42
    %v252 = vunpack.c.h.b16 %v42
    %v253 = vunpack.c.l.b16 %v43
    %v254 = vunpack.c.l.b16 %v44
    %v255 = vunpack.c.h.b16 %v44
    %v256 = vunpack.c.l.b16 %v45
    %v257 = vunpack.c.l.b16 %v46
    %v258 = vunpack.c.h.b16 %v46
    %v259 = vunpack.c.l.b16 %v47
    %v260 = vunpack.c.l.b16 %v48
    %v261 = vunpack.c.h.b16 %v48
    %v262 = vunpack.c.l.b16 %v49
    %v263 = vunpack.c.l.b16 %v50
    %v264 = vunpack.c.h.b16 %v50
    %v265 = vunpack.c.l.b16 %v51
    %v266 = vunpack.c.l.b16 %v52
    %v267 = vunpack.c.h.b16 %v52
    %v268 = vunpack.c.l.b16 %v53
    %v269 = vunpack.c.l.b16 %v54
    %v270 = vunpack.c.h.b16 %v54
    %v271 = vunpack.c.l.b16 %v55
    %v272 = vunpack.c.l.b16 %v56
    %v273 = vunpack.c.h.b16 %v56
    %v274 = vunpack.c.l.b16 %v57
    %v275 = vunpack.c.l.b16 %v58
    %v276 = vunpack.c.h.b16 %v58
    %v277 = vunpack.c.l.b16 %v59
    %v278 = vunpack.c.l.b16 %v60
    %v279 = vunpack.c.h.b16 %v60
    %v280 = vunpack.c.l.b16 %v61
    %v281 = vunpack.c.l.b16 %v62
    %v282 = vunpack.c.h.b16 %v62
    %v283 = vunpack.c.l.b16 %v63
    %v284 = vunpack.c.l.b16 %v64
    %v285 = vunpack.c.h.b16 %v64
    %v286 = vunpack.c.l.b16 %v65
    %v287 = vunpack.c.l.b16 %v66
    %v288 = vunpack.c.h.b16 %v66
    %v289 = vunpack.c.l.b16 %v67
    %v290 = vunpack.c.l.b16 %v68
    %v291 = vunpack.c.h.b16 %v68
    %v292 = vunpack.c.l.b16 %v69
    %v293 = vunpack.c.l.b16 %v70
    %v294 = vunpack.c.h.b16 %v70
    %v295 = vunpack.c.l.b16 %v71
    %v296 = vunpack.c.l.b16 %v72
    %v297 = vunpack.c.h.b16 %v72
    %v298 = vunpack.c.l.b16 %v73
    %v299 = vunpack.c.l.b16 %v74
    %v300 = vunpack.c.h.b16 %v74
    %v301 = vunpack.c.l.b16 %v75
    %v302 = vunpack.c.l.b16 %v76
    %v303 = vunpack.c.h.b16 %v76
    %v304 = vunpack.c.l.b16 %v77
    %v305 = vunpack.c.l.b16 %v78
    %v306 = vunpack.c.h.b16 %v78
    %v307 = vunpack.c.l.b16 %v79
    %v308 = vunpack.c.l.b16 %v80
    %v309 = vunpack.c.h.b16 %v80
    %v310 = vunpack.c.l.b16 %v81
    %v311 = vunpack.c.l.b16 %v82
    %v312 = vunpack.c.h.b16 %v82
    %v313 = vunpack.c.l.b16 %v83
    %v314 = vunpack.c.l.b16 %v84
    %v315 = vunpack.c.h.b16 %v84
    %v316 = vunpack.c.l.b16 %v85
    %v317 = vunpack.c.l.b16 %v86
    %v318 = vunpack.c.h.b16 %v86
    %v319 = vunpack.c.l.b16 %v87
    %v320 = vunpack.c.l.b16 %v88
    %v321 = vunpack.c.h.b16 %v88
    %v322 = vunpack.c.l.b16 %v89
    %v323 = vunpack.c.l.b16 %v90
    %v324 = vunpack.c.h.b16 %v90
    %v325 = vunpack.c.l.b16 %v91
    %v326 = vunpack.c.l.b16 %v92
    %v327 = vunpack.c.h.b16 %v92
    %v328 = vunpack.c.l.b16 %v93
    %v329 = vunpack.c.l.b16 %v94
    %v330 = vunpack.c.h.b16 %v94
    %v331 = vunpack.c.l.b16 %v95
    %v332 = vunpack.c.l.b16 %v96
    %v333 = vunpack.c.h.b16 %v96
    %v334 = vunpack.c.l.b16 %v97
    %v335 = vunpack.c.l.b16 %v98
    %v336 = vunpack.c.h.b16 %v98
    %v337 = vunpack.c.l.b16 %v99
    %v338 = vunpack.c.l.b16 %v100
    %v339 = vunpack.c.h.b16 %v100
    %v340 = vunpack.c.l.b16 %v101
    %v341 = vunpack.c.l.b16 %v102
    %v342 = vunpack.c.h.b16 %v102
    %v343 = vunpack.c.l.b16 %v103
    %v344 = vunpack.c.l.b16 %v104
    %v345 = vunpack.c.h.b16 %v104
    %v346 = vunpack.c.l.b16 %v105
    %v347 = vunpack.c.l.b16 %v106
    %v348 = vunpack.c.h.b16 %v106
    %v349 = vunpack.c.l.b16 %v107
    %v350 = vunpack.c.l.b16 %v108
    %v351 = vunpack.c.h.b16 %v108
    %v352 = vunpack.c.l.b16 %v109
    %v353 = vunpack.c.l.b16 %v110
    %v354 = vunpack.c.h.b16 %v110
    %v355 = vunpack.c.l.b16 %v111
    %v356 = vunpack.c.l.b16 %v112
    %v357 = vunpack.c.h.b16 %v112
    %v358 = vunpack.c.l.b16 %v113
    %v359 = vunpack.c.l.b16 %v114
    %v360 = vunpack.c.h.b16 %v114
    %v361 = vunpack.c.l.b16 %v115
    %v362 = vunpack.c.l.b16 %v116
    %v363 = vunpack.c.h.b16 %v116
    %v364 = vunpack.c.l.b16 %v117
    %v365 = vunpack.c.l.b16 %v118
    %v366 = vunpack.c.h.b16 %v118
    %v367 = vunpack.c.l.b16 %v119
    %v368 = vunpack.c.l.b16 %v120
    %v369 = vunpack.c.h.b16 %v120
    %v370 = vunpack.c.l.b16 %v121
    %v371 = vunpack.c.l.b16 %v122
    %v372 = vunpack.c.h.b16 %v122
    %v373 = vunpack.c.l.b16 %v123
    %v374 = vunpack.c.l.b16 %v124
    %v375 = vunpack.c.h.b16 %v124
    %v376 = vunpack.c.l.b16 %v125
    %v377 = vunpack.c.l.b16 %v126
    %v378 = vunpack.c.h.b16 %v126
    %v379 = vunpack.c.l.b16 %v127
    %v380 = vunpack.c.l.b16 %v128
    %v381 = vunpack.c.h.b16 %v128
    %v382 = vunpack.c.l.b16 %v129
    %v383 = vunpack.c.l.b16 %v130
    %v384 = vunpack.c.h.b16 %v130
    %v385 = vunpack.c.l.b16 %v131
    %v386 = vunpack.c.l.b16 %v132
    %v387 = vunpack.c.h.b16 %v132
    %v388 = vunpack.c.l.b16 %v133
    %v389 = vunpack.c.l.b16 %v134
    %v390 = vunpack.c.h.b16 %v134
    %v391 = vunpack.c.l.b16 %v135
    %v392 = vunpack.c.l.b16 %v136
    %v393 = vunpack.c.h.b16 %v136
    %v394 = vunpack.c.l.b16 %v137
    %v395 = vpack.c.b16 %v254, %v251
    %v396 = vpack.c.b16 %v255, %v252
    %v397 = vpack.c.b16 %v256, %v253
    %v398 = vpack.c.b16 %v260, %v257
    %v399 = vpack.c.b16 %v261, %v258
    %v400 = vpack.c.b16 %v262, %v259
    %v401 = vpack.c.b16 %v266, %v263
    %v402 = vpack.c.b16 %v267, %v264
    %v403 = vpack.c.b16 %v268, %v265
    %v404 = vpack.c.b16 %v272, %v269
    %v405 = vpack.c.b16 %v273, %v270
    %v406 = vpack.c.b16 %v274, %v271
    %v407 = vpack.c.b16 %v278, %v275
    %v408 = vpack.c.b16 %v279, %v276
    %v409 = vpack.c.b16 %v280, %v277
    %v410 = vpack.c.b16 %v284, %v281
    %v411 = vpack.c.b16 %v285, %v282
    %v412 = vpack.c.b16 %v286, %v283
    %v413 = vpack.c.b16 %v290, %v287
    %v414 = vpack.c.b16 %v291, %v288
    %v415 = vpack.c.b16 %v292, %v289
    %v416 = vpack.c.b16 %v296, %v293
    %v417 = vpack.c.b16 %v297, %v294
    %v418 = vpack.c.b16 %v298, %v295
    %v419 = vpack.c.b16 %v302, %v299
    %v420 = vpack.c.b16 %v303, %v300
    %v421 = vpack.c.b16 %v304, %v301
    %v422 = vpack.c.b16 %v308, %v305
    %v423 = vpack.c.b16 %v309, %v306
    %v424 = vpack.c.b16 %v310, %v307
    %v425 = vpack.c.b16 %v314, %v311
    %v426 = vpack.c.b16 %v315, %v312
    %v427 = vpack.c.b16 %v316, %v313
    %v428 = vpack.c.b16 %v320, %v317
    %v429 = vpack.c.b16 %v321, %v318
    %v430 = vpack.c.b16 %v322, %v319
    %v431 = vpack.c.b16 %v326, %v323
    %v432 = vpack.c.b16 %v327, %v324
    %v433 = vpack.c.b16 %v328, %v325
    %v434 = vpack.c.b16 %v332, %v329
    %v435 = vpack.c.b16 %v333, %v330
    %v436 = vpack.c.b16 %v334, %v331
    %v437 = vpack.c.b16 %v338, %v335
    %v438 = vpack.c.b16 %v339, %v336
    %v439 = vpack.c.b16 %v340, %v337
    %v440 = vpack.c.b16 %v344, %v341
    %v441 = vpack.c.b16 %v345, %v342
    %v442 = vpack.c.b16 %v346, %v343
    %v443 = vpack.c.b16 %v350, %v347
    %v444 = vpack.c.b16 %v351, %v348
    %v445 = vpack.c.b16 %v352, %v349
    %v446 = vpack.c.b16 %v356, %v353
    %v447 = vpack.c.b16 %v357, %v354
    %v448 = vpack.c.b16 %v358, %v355
    %v449 = vpack.c.b16 %v362, %v359
    %v450 = vpack.c.b16 %v363, %v360
    %v451 = vpack.c.b16 %v364, %v361
    %v452 = vpack.c.b16 %v368, %v365
    %v453 = vpack.c.b16 %v369, %v366
    %v454 = vpack.c.b16 %v370, %v367
    %v455 = vpack.c.b16 %v374, %v371
    %v456 = vpack.c.b16 %v375, %v372
    %v457 = vpack.c.b16 %v376, %v373
    %v458 = vpack.c.b16 %v380, %v377
    %v459 = vpack.c.b16 %v381, %v378
    %v460 = vpack.c.b16 %v382, %v379
    %v461 = vpack.c.b16 %v386, %v383
    %v462 = vpack.c.b16 %v387, %v384
    %v463 = vpack.c.b16 %v388, %v385
    %v464 = vpack.c.b16 %v392, %v389
    %v465 = vpack.c.b16 %v393, %v390
    %v466 = vpack.c.b16 %v394, %v391
    %539 = vmatprep.subr.bf16.mxu0 %v396
    %540 = vmatpush1.bf16.msra.mxu0 %v395
    %541 = vmatprep.subr.bf16.mxu0 %v399
    %542 = vmatpush1.bf16.msra.mxu0 %v398
    %543 = vmatprep.subr.bf16.mxu0 %v402
    %544 = vmatpush1.bf16.msra.mxu0 %v401
    %545 = vmatprep.subr.bf16.mxu0 %v405
    %546 = vmatpush1.bf16.msra.mxu0 %v404
    %547 = vmatprep.subr.bf16.mxu0 %v408
    %548 = vmatpush1.bf16.msra.mxu0 %v407
    %549 = vmatprep.subr.bf16.mxu0 %v411
    %550 = vmatpush1.bf16.msra.mxu0 %v410
    %551 = vmatprep.subr.bf16.mxu0 %v414
    %552 = vmatpush1.bf16.msra.mxu0 %v413
    %553 = vmatprep.subr.bf16.mxu0 %v417
    %554 = vmatpush1.bf16.msra.mxu0 %v416
    %555 = vmatprep.subr.bf16.mxu0 %v420
    %556 = vmatpush1.bf16.msra.mxu0 %v419
    %557 = vmatprep.subr.bf16.mxu0 %v423
    %558 = vmatpush1.bf16.msra.mxu0 %v422
    %559 = vmatprep.subr.bf16.mxu0 %v426
    %560 = vmatpush1.bf16.msra.mxu0 %v425
    %561 = vmatprep.subr.bf16.mxu0 %v429
    %562 = vmatpush1.bf16.msra.mxu0 %v428
    %563 = vmatprep.subr.bf16.mxu0 %v432
    %564 = vmatpush1.bf16.msra.mxu0 %v431
    %565 = vmatprep.subr.bf16.mxu0 %v435
    %566 = vmatpush1.bf16.msra.mxu0 %v434
    %567 = vmatprep.subr.bf16.mxu0 %v438
    %568 = vmatpush1.bf16.msra.mxu0 %v437
    %569 = vmatprep.subr.bf16.mxu0 %v441
    %570 = vmatpush1.bf16.msra.mxu0 %v440
    %571 = vmatprep.mubr.bf16.mxu0 %v40
    %572 = vmatmul.mubr.bf16.gmra.mrb[0].mxu0 %v39
    %v573 = vpop.f32.mrb[0].mxu0
    %v574 = vadd.f32 %v143, %v573
    %v575 = vpop.f32.mrb[0].mxu0
    %v576 = vadd.f32 %v147, %v575
    %v577 = vpop.f32.mrb[0].mxu0
    %v578 = vpop.f32.mrb[0].mxu0
    %579 = vdwg.mxu0
    %580 = vmatprep.subr.bf16.mxu0 %v444
    %581 = vmatpush1.bf16.msra.mxu0 %v443
    %582 = vmatprep.subr.bf16.mxu0 %v447
    %583 = vmatpush1.bf16.msra.mxu0 %v446
    %584 = vmatprep.subr.bf16.mxu0 %v450
    %585 = vmatpush1.bf16.msra.mxu0 %v449
    %586 = vmatprep.subr.bf16.mxu0 %v453
    %587 = vmatpush1.bf16.msra.mxu0 %v452
    %588 = vmatprep.subr.bf16.mxu0 %v456
    %589 = vmatpush1.bf16.msra.mxu0 %v455
    %590 = vmatprep.subr.bf16.mxu0 %v459
    %591 = vmatpush1.bf16.msra.mxu0 %v458
    %592 = vmatprep.subr.bf16.mxu0 %v462
    %593 = vmatpush1.bf16.msra.mxu0 %v461
    %594 = vmatprep.subr.bf16.mxu0 %v465
    %595 = vmatpush1.bf16.msra.mxu0 %v464
    %596 = vmatprep.subr.bf16.mxu0 0
    %597 = vmatpush1.bf16.msra.mxu0 0
    %598 = vmatprep.subr.bf16.mxu0 0
    %599 = vmatpush1.bf16.msra.mxu0 0
    %600 = vmatprep.subr.bf16.mxu0 0
    %601 = vmatpush1.bf16.msra.mxu0 0
    %602 = vmatprep.subr.bf16.mxu0 0
    %603 = vmatpush1.bf16.msra.mxu0 0
    %604 = vmatprep.subr.bf16.mxu0 0
    %605 = vmatpush1.bf16.msra.mxu0 0
    %606 = vmatprep.subr.bf16.mxu0 0
    %607 = vmatpush1.bf16.msra.mxu0 0
    %608 = vmatprep.subr.bf16.mxu0 0
    %609 = vmatpush1.bf16.msra.mxu0 0
    %610 = vmatprep.subr.bf16.mxu0 0
    %611 = vmatpush1.bf16.msra.mxu0 0
    %612 = vmatprep.mubr.bf16.mxu0 0
    %613 = vmatmul.mubr.bf16.gmra.mrb[0].mxu0 %v41
    %v614 = vpop.f32.mrb[0].mxu0
    %v615 = vadd.f32 %v574, %v614
    %v616 = vpop.f32.mrb[0].mxu0
    %v617 = vadd.f32 %v576, %v616
    %v618 = vpop.f32.mrb[0].mxu0
    %v619 = vpop.f32.mrb[0].mxu0
    %620 = vdwg.mxu0
    %621 = vmatprep.subr.bf16.mxu0 0
    %622 = vmatpush1.bf16.msra.mxu0 %v397
    %623 = vmatprep.subr.bf16.mxu0 0
    %624 = vmatpush1.bf16.msra.mxu0 %v400
    %625 = vmatprep.subr.bf16.mxu0 0
    %626 = vmatpush1.bf16.msra.mxu0 %v403
    %627 = vmatprep.subr.bf16.mxu0 0
    %628 = vmatpush1.bf16.msra.mxu0 %v406
    %629 = vmatprep.subr.bf16.mxu0 0
    %630 = vmatpush1.bf16.msra.mxu0 %v409
    %631 = vmatprep.subr.bf16.mxu0 0
    %632 = vmatpush1.bf16.msra.mxu0 %v412
    %633 = vmatprep.subr.bf16.mxu0 0
    %634 = vmatpush1.bf16.msra.mxu0 %v415
    %635 = vmatprep.subr.bf16.mxu0 0
    %636 = vmatpush1.bf16.msra.mxu0 %v418
    %637 = vmatprep.subr.bf16.mxu0 0
    %638 = vmatpush1.bf16.msra.mxu0 %v421
    %639 = vmatprep.subr.bf16.mxu0 0
    %640 = vmatpush1.bf16.msra.mxu0 %v424
    %641 = vmatprep.subr.bf16.mxu0 0
    %642 = vmatpush1.bf16.msra.mxu0 %v427
    %643 = vmatprep.subr.bf16.mxu0 0
    %644 = vmatpush1.bf16.msra.mxu0 %v430
    %645 = vmatprep.subr.bf16.mxu0 0
    %646 = vmatpush1.bf16.msra.mxu0 %v433
    %647 = vmatprep.subr.bf16.mxu0 0
    %648 = vmatpush1.bf16.msra.mxu0 %v436
    %649 = vmatprep.subr.bf16.mxu0 0
    %650 = vmatpush1.bf16.msra.mxu0 %v439
    %651 = vmatprep.subr.bf16.mxu0 0
    %652 = vmatpush1.bf16.msra.mxu0 %v442
    %653 = vmatprep.mubr.bf16.mxu0 %v40
    %654 = vmatmul.mubr.bf16.gmra.mrb[0].mxu0 %v39
    %v655 = vpop.f32.mrb[0].mxu0
    %v656 = vadd.f32 %v151, %v655
    %v657 = vpop.f32.mrb[0].mxu0
    %v658 = vpop.f32.mrb[0].mxu0
    %v659 = vpop.f32.mrb[0].mxu0
    %660 = vdwg.mxu0
    %661 = vmatprep.subr.bf16.mxu0 0
    %662 = vmatpush1.bf16.msra.mxu0 %v445
    %663 = vmatprep.subr.bf16.mxu0 0
    %664 = vmatpush1.bf16.msra.mxu0 %v448
    %665 = vmatprep.subr.bf16.mxu0 0
    %666 = vmatpush1.bf16.msra.mxu0 %v451
    %667 = vmatprep.subr.bf16.mxu0 0
    %668 = vmatpush1.bf16.msra.mxu0 %v454
    %669 = vmatprep.subr.bf16.mxu0 0
    %670 = vmatpush1.bf16.msra.mxu0 %v457
    %671 = vmatprep.subr.bf16.mxu0 0
    %672 = vmatpush1.bf16.msra.mxu0 %v460
    %673 = vmatprep.subr.bf16.mxu0 0
    %674 = vmatpush1.bf16.msra.mxu0 %v463
    %675 = vmatprep.subr.bf16.mxu0 0
    %676 = vmatpush1.bf16.msra.mxu0 %v466
    %677 = vmatprep.subr.bf16.mxu0 0
    %678 = vmatpush1.bf16.msra.mxu0 0
    %679 = vmatprep.subr.bf16.mxu0 0
    %680 = vmatpush1.bf16.msra.mxu0 0
    %681 = vmatprep.subr.bf16.mxu0 0
    %682 = vmatpush1.bf16.msra.mxu0 0
    %683 = vmatprep.subr.bf16.mxu0 0
    %684 = vmatpush1.bf16.msra.mxu0 0
    %685 = vmatprep.subr.bf16.mxu0 0
    %686 = vmatpush1.bf16.msra.mxu0 0
    %687 = vmatprep.subr.bf16.mxu0 0
    %688 = vmatpush1.bf16.msra.mxu0 0
    %689 = vmatprep.subr.bf16.mxu0 0
    %690 = vmatpush1.bf16.msra.mxu0 0
    %691 = vmatprep.subr.bf16.mxu0 0
    %692 = vmatpush1.bf16.msra.mxu0 0
    %693 = vmatprep.mubr.bf16.mxu0 0
    %694 = vmatmul.mubr.bf16.gmra.mrb[0].mxu0 %v41
    %v695 = vpop.f32.mrb[0].mxu0
    %v696 = vadd.f32 %v656, %v695
    %v697 = vpop.f32.mrb[0].mxu0
    %v698 = vpop.f32.mrb[0].mxu0
    %v699 = vpop.f32.mrb[0].mxu0
    %700 = vdwg.mxu0
    %v701 = vmax.f32 %v615, 0.0
    %v702 = vmax.f32 %v617, 0.0
    %v703 = vmax.f32 %v696, 0.0
    %v704 = vpack.c.bf16 %v701, %v701
    %v705 = vpack.c.bf16 %v702, %v702
    %v706 = vpack.c.bf16 %v703, %v703
    %v707 = vld [vmem:[%s3] sm:$0xf]
    %v708 = vld [vmem:[%s3 + $0x4] sm:$0xf]
    %v709 = vld [vmem:[%s3 + $0x8] sm:$0xf]
    %v710 = vld [vmem:[%s3 + $0xc] sm:$0xf]
    %v711 = vld [vmem:[%s3 + $0x10] sm:$0xf]
    %v712 = vld [vmem:[%s3 + $0x14] sm:$0xf]
    %v713 = vld [vmem:[%s3 + $0x18] sm:$0xf]
    %v714 = vld [vmem:[%s3 + $0x1c] sm:$0xf]
    %v715 = vld [vmem:[%s3 + $0x20] sm:$0xf]
    %v716 = vld [vmem:[%s3 + $0x24] sm:$0xf]
    %v717 = vld [vmem:[%s3 + $0x28] sm:$0xf]
    %v718 = vld [vmem:[%s3 + $0x2c] sm:$0xf]
    %v719 = vld [vmem:[%s3 + $0x30] sm:$0xf]
    %v720 = vld [vmem:[%s3 + $0x34] sm:$0xf]
    %v721 = vld [vmem:[%s3 + $0x38] sm:$0xf]
    %v722 = vld [vmem:[%s3 + $0x3c] sm:$0xf]
    %v723 = vld [vmem:[%s3 + $0x40] sm:$0xf]
    %v724 = vld [vmem:[%s3 + $0x44] sm:$0xf]
    %v725 = vld [vmem:[%s3 + $0x48] sm:$0xf]
    %v726 = vld [vmem:[%s3 + $0x4c] sm:$0xf]
    %v727 = vld [vmem:[%s3 + $0x50] sm:$0xf]
    %v728 = vld [vmem:[%s3 + $0x54] sm:$0xf]
    %v729 = vld [vmem:[%s3 + $0x58] sm:$0xf]
    %v730 = vld [vmem:[%s3 + $0x5c] sm:$0xf]
    %v731 = vld [vmem:[%s3 + $0x60] sm:$0xf]
    %v732 = vld [vmem:[%s3 + $0x64] sm:$0xf]
    %v733 = vld [vmem:[%s3 + $0x68] sm:$0xf]
    %v734 = vld [vmem:[%s3 + $0x6c] sm:$0xf]
    %v735 = vld [vmem:[%s3 + $0x70] sm:$0xf]
    %v736 = vld [vmem:[%s3 + $0x74] sm:$0xf]
    %v737 = vld [vmem:[%s3 + $0x78] sm:$0xf]
    %v738 = vld [vmem:[%s3 + $0x7c] sm:$0xf]
    %v739 = vld [vmem:[%s3 + $0x80] sm:$0xf]
    %v740 = vld [vmem:[%s3 + $0x84] sm:$0xf]
    %v741 = vld [vmem:[%s3 + $0x88] sm:$0xf]
    %v742 = vld [vmem:[%s3 + $0x8c] sm:$0xf]
    %v743 = vld [vmem:[%s3 + $0x90] sm:$0xf]
    %v744 = vld [vmem:[%s3 + $0x94] sm:$0xf]
    %v745 = vld [vmem:[%s3 + $0x98] sm:$0xf]
    %v746 = vld [vmem:[%s3 + $0x9c] sm:$0xf]
    %v747 = vld [vmem:[%s3 + $0xa0] sm:$0xf]
    %v748 = vld [vmem:[%s3 + $0xa4] sm:$0xf]
    %v749 = vld [vmem:[%s3 + $0xa8] sm:$0xf]
    %v750 = vld [vmem:[%s3 + $0xac] sm:$0xf]
    %v751 = vld [vmem:[%s3 + $0xb0] sm:$0xf]
    %v752 = vld [vmem:[%s3 + $0xb4] sm:$0xf]
    %v753 = vld [vmem:[%s3 + $0xb8] sm:$0xf]
    %v754 = vld [vmem:[%s3 + $0xbc] sm:$0xf]
    %v755 = vld [vmem:[%s4] sm:$0x1]
    %v757 = vlaneseq
    %v758 = vshrl.u32 %v757, 7
    %v759 = vsub.s32 0, %v758
    %v760 = vrot.slane %v755, %v759
    %v810 = vunpack.c.l.b16 %v707
    %v811 = vunpack.c.l.b16 %v708
    %v812 = vunpack.c.l.b16 %v709
    %v813 = vunpack.c.l.b16 %v710
    %v814 = vunpack.c.l.b16 %v711
    %v815 = vunpack.c.l.b16 %v712
    %v816 = vunpack.c.l.b16 %v713
    %v817 = vunpack.c.l.b16 %v714
    %v818 = vunpack.c.l.b16 %v715
    %v819 = vunpack.c.l.b16 %v716
    %v820 = vunpack.c.l.b16 %v717
    %v821 = vunpack.c.l.b16 %v718
    %v822 = vunpack.c.l.b16 %v719
    %v823 = vunpack.c.l.b16 %v720
    %v824 = vunpack.c.l.b16 %v721
    %v825 = vunpack.c.l.b16 %v722
    %v826 = vunpack.c.l.b16 %v723
    %v827 = vunpack.c.l.b16 %v724
    %v828 = vunpack.c.l.b16 %v725
    %v829 = vunpack.c.l.b16 %v726
    %v830 = vunpack.c.l.b16 %v727
    %v831 = vunpack.c.l.b16 %v728
    %v832 = vunpack.c.l.b16 %v729
    %v833 = vunpack.c.l.b16 %v730
    %v834 = vunpack.c.l.b16 %v731
    %v835 = vunpack.c.l.b16 %v732
    %v836 = vunpack.c.l.b16 %v733
    %v837 = vunpack.c.l.b16 %v734
    %v838 = vunpack.c.l.b16 %v735
    %v839 = vunpack.c.l.b16 %v736
    %v840 = vunpack.c.l.b16 %v737
    %v841 = vunpack.c.l.b16 %v738
    %v842 = vunpack.c.l.b16 %v739
    %v843 = vunpack.c.l.b16 %v740
    %v844 = vunpack.c.l.b16 %v741
    %v845 = vunpack.c.l.b16 %v742
    %v846 = vunpack.c.l.b16 %v743
    %v847 = vunpack.c.l.b16 %v744
    %v848 = vunpack.c.l.b16 %v745
    %v849 = vunpack.c.l.b16 %v746
    %v850 = vunpack.c.l.b16 %v747
    %v851 = vunpack.c.l.b16 %v748
    %v852 = vunpack.c.l.b16 %v749
    %v853 = vunpack.c.l.b16 %v750
    %v854 = vunpack.c.l.b16 %v751
    %v855 = vunpack.c.l.b16 %v752
    %v856 = vunpack.c.l.b16 %v753
    %v857 = vunpack.c.l.b16 %v754
    %v858 = vpack.c.b16 %v811, %v810
    %v859 = vpack.c.b16 %v813, %v812
    %v860 = vpack.c.b16 %v815, %v814
    %v861 = vpack.c.b16 %v817, %v816
    %v862 = vpack.c.b16 %v819, %v818
    %v863 = vpack.c.b16 %v821, %v820
    %v864 = vpack.c.b16 %v823, %v822
    %v865 = vpack.c.b16 %v825, %v824
    %v866 = vpack.c.b16 %v827, %v826
    %v867 = vpack.c.b16 %v829, %v828
    %v868 = vpack.c.b16 %v831, %v830
    %v869 = vpack.c.b16 %v833, %v832
    %v870 = vpack.c.b16 %v835, %v834
    %v871 = vpack.c.b16 %v837, %v836
    %v872 = vpack.c.b16 %v839, %v838
    %v873 = vpack.c.b16 %v841, %v840
    %v874 = vpack.c.b16 %v843, %v842
    %v875 = vpack.c.b16 %v845, %v844
    %v876 = vpack.c.b16 %v847, %v846
    %v877 = vpack.c.b16 %v849, %v848
    %v878 = vpack.c.b16 %v851, %v850
    %v879 = vpack.c.b16 %v853, %v852
    %v880 = vpack.c.b16 %v855, %v854
    %v881 = vpack.c.b16 %v857, %v856
    %906 = vmatprep.subr.bf16.mxu0 0
    %907 = vmatpush1.bf16.msra.mxu0 %v858
    %908 = vmatprep.subr.bf16.mxu0 0
    %909 = vmatpush1.bf16.msra.mxu0 %v859
    %910 = vmatprep.subr.bf16.mxu0 0
    %911 = vmatpush1.bf16.msra.mxu0 %v860
    %912 = vmatprep.subr.bf16.mxu0 0
    %913 = vmatpush1.bf16.msra.mxu0 %v861
    %914 = vmatprep.subr.bf16.mxu0 0
    %915 = vmatpush1.bf16.msra.mxu0 %v862
    %916 = vmatprep.subr.bf16.mxu0 0
    %917 = vmatpush1.bf16.msra.mxu0 %v863
    %918 = vmatprep.subr.bf16.mxu0 0
    %919 = vmatpush1.bf16.msra.mxu0 %v864
    %920 = vmatprep.subr.bf16.mxu0 0
    %921 = vmatpush1.bf16.msra.mxu0 %v865
    %922 = vmatprep.subr.bf16.mxu0 0
    %923 = vmatpush1.bf16.msra.mxu0 %v866
    %924 = vmatprep.subr.bf16.mxu0 0
    %925 = vmatpush1.bf16.msra.mxu0 %v867
    %926 = vmatprep.subr.bf16.mxu0 0
    %927 = vmatpush1.bf16.msra.mxu0 %v868
    %928 = vmatprep.subr.bf16.mxu0 0
    %929 = vmatpush1.bf16.msra.mxu0 %v869
    %930 = vmatprep.subr.bf16.mxu0 0
    %931 = vmatpush1.bf16.msra.mxu0 %v870
    %932 = vmatprep.subr.bf16.mxu0 0
    %933 = vmatpush1.bf16.msra.mxu0 %v871
    %934 = vmatprep.subr.bf16.mxu0 0
    %935 = vmatpush1.bf16.msra.mxu0 %v872
    %936 = vmatprep.subr.bf16.mxu0 0
    %937 = vmatpush1.bf16.msra.mxu0 %v873
    %938 = vmatprep.mubr.bf16.mxu0 %v705
    %939 = vmatmul.mubr.bf16.gmra.mrb[0].mxu0 %v704
    %v940 = vpop.f32.mrb[0].mxu0
    %v941 = vadd.f32 %v760, %v940
    %v942 = vpop.f32.mrb[0].mxu0
    %v943 = vpop.f32.mrb[0].mxu0
    %v944 = vpop.f32.mrb[0].mxu0
    %945 = vdwg.mxu0
    %946 = vmatprep.subr.bf16.mxu0 0
    %947 = vmatpush1.bf16.msra.mxu0 %v874
    %948 = vmatprep.subr.bf16.mxu0 0
    %949 = vmatpush1.bf16.msra.mxu0 %v875
    %950 = vmatprep.subr.bf16.mxu0 0
    %951 = vmatpush1.bf16.msra.mxu0 %v876
    %952 = vmatprep.subr.bf16.mxu0 0
    %953 = vmatpush1.bf16.msra.mxu0 %v877
    %954 = vmatprep.subr.bf16.mxu0 0
    %955 = vmatpush1.bf16.msra.mxu0 %v878
    %956 = vmatprep.subr.bf16.mxu0 0
    %957 = vmatpush1.bf16.msra.mxu0 %v879
    %958 = vmatprep.subr.bf16.mxu0 0
    %959 = vmatpush1.bf16.msra.mxu0 %v880
    %960 = vmatprep.subr.bf16.mxu0 0
    %961 = vmatpush1.bf16.msra.mxu0 %v881
    %962 = vmatprep.subr.bf16.mxu0 0
    %963 = vmatpush1.bf16.msra.mxu0 0
    %964 = vmatprep.subr.bf16.mxu0 0
    %965 = vmatpush1.bf16.msra.mxu0 0
    %966 = vmatprep.subr.bf16.mxu0 0
    %967 = vmatpush1.bf16.msra.mxu0 0
    %968 = vmatprep.subr.bf16.mxu0 0
    %969 = vmatpush1.bf16.msra.mxu0 0
    %970 = vmatprep.subr.bf16.mxu0 0
    %971 = vmatpush1.bf16.msra.mxu0 0
    %972 = vmatprep.subr.bf16.mxu0 0
    %973 = vmatpush1.bf16.msra.mxu0 0
    %974 = vmatprep.subr.bf16.mxu0 0
    %975 = vmatpush1.bf16.msra.mxu0 0
    %976 = vmatprep.subr.bf16.mxu0 0
    %977 = vmatpush1.bf16.msra.mxu0 0
    %978 = vmatprep.mubr.bf16.mxu0 0
    %979 = vmatmul.mubr.bf16.gmra.mrb[0].mxu0 %v706
    %v980 = vpop.f32.mrb[0].mxu0
    %v981 = vadd.f32 %v941, %v980
    %v982 = vpop.f32.mrb[0].mxu0
    %v983 = vpop.f32.mrb[0].mxu0
    %v984 = vpop.f32.mrb[0].mxu0
    %985 = vdwg.mxu0
    %vm986 = vcmask 523264
    %987 = vst.msk [vmem:[#allocation5] sm:$0xff] %vm986, %v981
    // Predicated region
    $region26: #{tpu_custom_call.1} parent=1 // pred_check
      _
    $region27: #{tpu_custom_call.1} parent=1 // pred_check_branch
      %989 = sbr.rel (0) target = $region29
    $region28: #{tpu_custom_call.1} parent=1 // pred_region
      %s991 = ssub.s32 128, 128
      %992 = vsyncadd [#allocation4], %s991
      %s994 = sshll.u32 [#allocation5], 4
      %s995 = int_to_ptr.vmem [resolvable:$true] %s994
      %997 = dma.vmem_to_hbm [thread:$0]  %s995, 128, %s5, [#allocation4]
    $region29: #{tpu_custom_call.1} parent=1 // pred_fallthru
      _
    // Predicated region
    $region30: #{tpu_custom_call.1} parent=1 // pred_check
      _
    $region31: #{tpu_custom_call.1} parent=1 // pred_check_branch
      %999 = sbr.rel (0) target = $region33
    $region32: #{tpu_custom_call.1} parent=1 // pred_region
      %1000 = dma.done [#allocation4], 128
    $region33: #{tpu_custom_call.1} parent=1 // pred_fallthru
      _
    %1001 = vsyncpa [#allocation3], 1
    %1002 = vsyncpa [#allocation4], 1

</llo_original>
